<compile_context>
chip_gen: v6e
topology: v6e:2x2x1
jax: 0.10.0
libtpu: 0.0.40
codegen_flags: <defaults>
</compile_context>

<pallas_src>
import jax
import jax.numpy as jnp
from jax.experimental import pallas as pl
from jax.experimental.pallas import tpu as pltpu

N = 40  # torch.arange(40.0) fixes the working length

# Trace-time constant: 2 * arange(40), shaped (1, N) lane-major.
_TWO_IOTA = jnp.arange(0.0, 2.0 * N, 2.0, dtype=jnp.float32).reshape(1, N)


def _fused_kernel(x_ref, c_ref, o_ref):
    # x_ref, c_ref, o_ref: (1, N) f32, resident in VMEM (whole-array blocks).
    # out = min(x + 2*iota, 10)  -- one add, one min on the VPU.
    o_ref[...] = jnp.minimum(x_ref[...] + c_ref[...], 10.0)


_fused_call = pl.pallas_call(
    _fused_kernel,
    out_shape=jax.ShapeDtypeStruct((1, N), jnp.float32),
    in_specs=[
        pl.BlockSpec(memory_space=pltpu.MemorySpace.VMEM),
        pl.BlockSpec(memory_space=pltpu.MemorySpace.VMEM),
    ],
    out_specs=pl.BlockSpec(memory_space=pltpu.MemorySpace.VMEM),
    input_output_aliases={0: 0},  # output reuses x's buffer
    cost_estimate=pl.CostEstimate(
        flops=2 * N, transcendentals=0, bytes_accessed=3 * 4 * N
    ),
)


@jax.jit
def model_forward(x):
    """x: array of shape (40,). Returns min(x + 2*arange(40), 10) as f32."""
    if x.dtype != jnp.float32:  # trace-time check; no-op when already f32
        x = x.astype(jnp.float32)
    x2d = x.reshape(1, N)  # free lane-major 2-D view
    return _fused_call(x2d, _TWO_IOTA).reshape(N)


def _reference(x):
    y = jnp.arange(40.0, dtype=jnp.float32)
    x = x + y
    y = y + x
    return jnp.minimum(y, 10.0)


if __name__ == "__main__":
    key = jax.random.PRNGKey(0)
    x = jax.random.normal(key, (N,), dtype=jnp.float32)

    ref = _reference(x)

    out = model_forward(x)
    jax.block_until_ready(out)

    assert out.shape == (N,) and out.dtype == jnp.float32
    assert jnp.allclose(out, ref, atol=1e-6), "mismatch vs reference"
    print("KERNEL_OK")
</pallas_src>

<mosaic_0001>
module attributes {stable_mosaic.version = 11 : i64} {
  func.func @_fused_kernel(%arg0: memref<1x40xf32, #tpu.memory_space<vmem>>, %arg1: memref<1x40xf32, #tpu.memory_space<vmem>>, %arg2: memref<1x40xf32, #tpu.memory_space<vmem>>) attributes {dimension_semantics = [], scalar_prefetch = 0 : i64, scratch_operands = 0 : i64, tpu.core_type = #tpu.core_type<tc>} {
    %c0 = arith.constant 0 : index
    %c0_0 = arith.constant 0 : index
    %0 = vector.load %arg0[%c0, %c0_0] : memref<1x40xf32, #tpu.memory_space<vmem>>, vector<1x40xf32>
    %c0_1 = arith.constant 0 : index
    %c0_2 = arith.constant 0 : index
    %1 = vector.load %arg1[%c0_1, %c0_2] : memref<1x40xf32, #tpu.memory_space<vmem>>, vector<1x40xf32>
    %2 = arith.addf %0, %1 : vector<1x40xf32>
    %cst = arith.constant 1.000000e+01 : f32
    %3 = vector.broadcast %cst : f32 to vector<1x40xf32>
    %4 = arith.minimumf %2, %3 : vector<1x40xf32>
    %c0_3 = arith.constant 0 : index
    %c0_4 = arith.constant 0 : index
    %5 = vector.load %arg2[%c0_3, %c0_4] : memref<1x40xf32, #tpu.memory_space<vmem>>, vector<1x40xf32>
    tpu.vector_store %arg2[%c0_3, %c0_4], %4 {strides = array<i32>} : memref<1x40xf32, #tpu.memory_space<vmem>>, vector<1x40xf32>,
    return
  }
}

</mosaic_0001>

<llo_original>
// kernel: model_forward.1
$region0: #{model_forward.1}
  #allocation0 [shape = 'u32[]', space=smem, size = 0x4, offset = 0x4, fixed_abs, tag = 'smem constant byte address 0x4 - core index']
  #allocation1 [shape = 'u32[144,128]{1,0:T(1,128)}', space=vmem, size = 0x12000, scoped, tag = 'internal scratch']
  %s0 = inlined_call_operand.vmem [shape: f32[1,40], index: 0, kind: input, shape index: {}, may-alias: {0,2}]
  %s1 = inlined_call_operand.vmem [shape: f32[1,40], index: 1, kind: input, shape index: {}]
  %s2 = inlined_call_operand.vmem [shape: f32[1,40], index: 2, kind: output, shape index: {}, may-alias: {0,2}]
  %s3 = sld [smem:[#allocation0]]
  $region18: #{model_forward.1} parent=0
    _
  %s5 = ssub.s32 1, %s3
  %s6 = scalar_select 0, %s5, %s3
  // Predicated region
  $region2: #{model_forward.1} parent=0 // pred_check
    _
  $region3: #{model_forward.1} parent=0 // pred_check_branch
    %8 = sbr.rel (0) target = $region5
  $region4: #{model_forward.1} parent=0 // pred_region
    _
  $region5: #{model_forward.1} parent=0 // pred_fallthru
    _
  // Predicated region
  $region6: #{model_forward.1} parent=0 // pred_check
    _
  $region7: #{model_forward.1} parent=0 // pred_check_branch
    %10 = sbr.rel (0) target = $region9
  $region8: #{model_forward.1} parent=0 // pred_region
    _
  $region9: #{model_forward.1} parent=0 // pred_fallthru
    _
  %v11 = vld [vmem:[%s0] sm:$0x1]
  %v12 = vld [vmem:[%s1] sm:$0x1]
  %v13 = vadd.f32 %v11, %v12
  %v14 = vmin.f32 %v13, 10.0
  %vm15 = vcmask 319488
  %16 = vst.msk [vmem:[%s2] sm:$0x1] %vm15, %v14
  // Predicated region
  $region10: #{model_forward.1} parent=0 // pred_check
    _
  $region11: #{model_forward.1} parent=0 // pred_check_branch
    %18 = sbr.rel (0) target = $region13
  $region12: #{model_forward.1} parent=0 // pred_region
    _
  $region13: #{model_forward.1} parent=0 // pred_fallthru
    _
  // Predicated region
  $region14: #{model_forward.1} parent=0 // pred_check
    _
  $region15: #{model_forward.1} parent=0 // pred_check_branch
    %20 = sbr.rel (0) target = $region17
  $region16: #{model_forward.1} parent=0 // pred_region
    _
  $region17: #{model_forward.1} parent=0 // pred_fallthru
    _

</llo_original>
